<compile_context>
chip_gen: v6e
topology: v6e:2x2x1
jax: 0.10.0
libtpu: 0.0.40
codegen_flags: <defaults>
</compile_context>

<pallas_src>
import functools
import math

import jax
import jax.numpy as jnp
from jax.experimental import pallas as pl
from jax.experimental.pallas import tpu as pltpu

EPS = 1e-5  # BatchNorm eps


def _round_up(v, m):
    return ((v + m - 1) // m) * m


# -----------------------------------------------------------------------------
# Pallas kernels
# -----------------------------------------------------------------------------
def _conv_mm_kernel(*refs, has_residual, apply_relu):
    """bf16 patches @ bf16 w (f32 acc), + BN bias, optional residual, ReLU."""
    if has_residual:
        x_ref, w_ref, b_ref, r_ref, o_ref = refs
    else:
        x_ref, w_ref, b_ref, o_ref = refs
        r_ref = None
    acc = jnp.dot(x_ref[...], w_ref[...], preferred_element_type=jnp.float32)
    acc = acc + b_ref[...]                       # per-channel BN bias (f32)
    if has_residual:
        acc = acc + r_ref[...]                   # residual add in f32
    if apply_relu:
        acc = jnp.maximum(acc, 0.0)
    o_ref[...] = acc.astype(o_ref.dtype)


def _gate_kernel(x_ref, d_ref, o_ref):
    # x + x * sigmoid(d); d is [tp, 1] and broadcast in-VMEM along lanes.
    o_ref[...] = x_ref[...] * (1.0 + jax.nn.sigmoid(d_ref[...]))


# -----------------------------------------------------------------------------
# Conv = im2col (bf16) + tiled MXU matmul with fused BN-bias / residual / ReLU
# -----------------------------------------------------------------------------
def conv_bn_act(patches, w, bias, residual=None, apply_relu=True, tp_target=512):
    """patches: [P, Kp] bf16, w: [Kp, N] bf16, bias: [N] f32, residual [P,N] f32."""
    P, Kp = patches.shape
    N = w.shape[1]
    assert w.shape[0] == Kp

    tn = 128 if N % 128 == 0 else N              # output-channel tile
    tp = min(tp_target, _round_up(P, 8))         # row tile (<=512, 8-aligned)
    Pp = _round_up(P, tp)
    if Pp != P:                                  # pad rows so tp divides P
        patches = jnp.pad(patches, ((0, Pp - P), (0, 0)))
        if residual is not None:
            residual = jnp.pad(residual, ((0, Pp - P), (0, 0)))

    bias2 = bias.reshape(1, N).astype(jnp.float32)
    grid = (Pp // tp, N // tn)

    in_specs = [
        pl.BlockSpec((tp, Kp), lambda i, j: (i, 0)),   # patches tile
        pl.BlockSpec((Kp, tn), lambda i, j: (0, j)),   # weight tile
        pl.BlockSpec((1, tn), lambda i, j: (0, j)),    # BN bias
    ]
    args = [patches, w, bias2]
    if residual is not None:
        in_specs.append(pl.BlockSpec((tp, tn), lambda i, j: (i, j)))
        args.append(residual.astype(jnp.float32))

    kernel = functools.partial(
        _conv_mm_kernel,
        has_residual=residual is not None,
        apply_relu=apply_relu,
    )

    flops = 2 * Pp * Kp * N
    bytes_accessed = (
        int(patches.size) * patches.dtype.itemsize
        + int(w.size) * w.dtype.itemsize * grid[0]
        + Pp * N * 4
        + (Pp * N * 4 if residual is not None else 0)
    )

    out = pl.pallas_call(
        kernel,
        out_shape=jax.ShapeDtypeStruct((Pp, N), jnp.float32),
        grid=grid,
        in_specs=in_specs,
        out_specs=pl.BlockSpec((tp, tn), lambda i, j: (i, j)),
        compiler_params=pltpu.CompilerParams(
            dimension_semantics=("parallel", "parallel"),
            vmem_limit_bytes=48 * 1024 * 1024,   # fits v7x 64 MiB w/ headroom
        ),
        cost_estimate=pl.CostEstimate(
            flops=flops, transcendentals=0, bytes_accessed=bytes_accessed),
    )(*args)
    return out[:P] if Pp != P else out


def im2col(x, kh, kw, stride, pad):
    """x: [N,H,W,C] f32 -> bf16 patches [N*Ho*Wo, kh*kw*C] (kh,kw major; C minor)."""
    n, h, w, c = x.shape
    ho = (h + 2 * pad - kh) // stride + 1
    wo = (w + 2 * pad - kw) // stride + 1
    xp = jnp.pad(x, ((0, 0), (pad, pad), (pad, pad), (0, 0)))
    taps = []
    for dh in range(kh):
        for dw in range(kw):
            taps.append(
                xp[:, dh:dh + stride * (ho - 1) + 1:stride,
                      dw:dw + stride * (wo - 1) + 1:stride, :])
    patches = jnp.stack(taps, axis=3)            # [N, Ho, Wo, kh*kw, C]
    patches = patches.reshape(n * ho * wo, kh * kw * c).astype(jnp.bfloat16)
    return patches, (n, ho, wo)


def conv_bn(x, cp, stride, pad, residual=None, apply_relu=True):
    patches, (n, ho, wo) = im2col(x, cp["kh"], cp["kw"], stride, pad)
    Kp = cp["w"].shape[0]
    if Kp != patches.shape[1]:                   # zero-pad K to 128 multiple
        patches = jnp.pad(patches, ((0, 0), (0, Kp - patches.shape[1])))
    res_flat = None if residual is None else residual.reshape(n * ho * wo, -1)
    out = conv_bn_act(patches, cp["w"], cp["b"], res_flat, apply_relu)
    return out.reshape(n, ho, wo, -1)


# -----------------------------------------------------------------------------
# Max-pool (pure mem-bound -> XLA pairwise max of the 9 taps, per perf review)
# -----------------------------------------------------------------------------
def maxpool_3x3_s2(x):
    """MaxPool2d(kernel=3, stride=2, padding=1) on NHWC."""
    n, h, w, c = x.shape
    ho = (h + 2 - 3) // 2 + 1
    wo = (w + 2 - 3) // 2 + 1
    neg = jnp.finfo(x.dtype).min
    xp = jnp.pad(x, ((0, 0), (1, 1), (1, 1), (0, 0)), constant_values=neg)
    out = None
    for dh in range(3):
        for dw in range(3):
            tap = xp[:, dh:dh + 2 * (ho - 1) + 1:2,
                        dw:dw + 2 * (wo - 1) + 1:2, :]
            out = tap if out is None else jnp.maximum(out, tap)
    return out


# -----------------------------------------------------------------------------
# Depth gate: x + x * sigmoid(d), tiled over P, depth broadcast in-kernel
# -----------------------------------------------------------------------------
def sigmoid_gate(x, d, tp_target=512):
    """x: [N,H,W,C] f32, d: [N,H,W,1] f32."""
    n, h, w, c = x.shape
    P = n * h * w
    xf = x.reshape(P, c)
    df = d.reshape(P, 1)
    tp = min(tp_target, _round_up(P, 8))
    Pp = _round_up(P, tp)
    if Pp != P:
        xf = jnp.pad(xf, ((0, Pp - P), (0, 0)))
        df = jnp.pad(df, ((0, Pp - P), (0, 0)))
    out = pl.pallas_call(
        _gate_kernel,
        out_shape=jax.ShapeDtypeStruct((Pp, c), x.dtype),
        grid=(Pp // tp,),
        in_specs=[pl.BlockSpec((tp, c), lambda i: (i, 0)),
                  pl.BlockSpec((tp, 1), lambda i: (i, 0))],
        out_specs=pl.BlockSpec((tp, c), lambda i: (i, 0)),
        compiler_params=pltpu.CompilerParams(
            dimension_semantics=("parallel",)),
    )(xf, df)
    return out[:P].reshape(n, h, w, c)


def nearest_resize_nchw_to_nhwc(depth, out_h, out_w):
    """F.interpolate(mode='nearest') on NCHW depth; returns NHWC."""
    _, _, h, w = depth.shape
    hi = jnp.floor(jnp.arange(out_h) * (h / out_h)).astype(jnp.int32)
    wi = jnp.floor(jnp.arange(out_w) * (w / out_w)).astype(jnp.int32)
    d = depth[:, :, hi, :][:, :, :, wi]
    return jnp.transpose(d, (0, 2, 3, 1))


# -----------------------------------------------------------------------------
# Parameter prep: kaiming-normal fan_out convs; inference-mode BN (gamma=1,
# beta=0, mean=0, var=1) folded into the weights -> only a bias remains;
# K zero-padded to a 128 multiple; weights stored in bf16.
# -----------------------------------------------------------------------------
def make_conv(key, kh, kw, cin, cout):
    fan_out = cout * kh * kw
    std = math.sqrt(2.0 / fan_out)
    w = std * jax.random.normal(key, (kh, kw, cin, cout), dtype=jnp.float32)
    w = w.reshape(kh * kw * cin, cout)
    bn_scale = 1.0 / math.sqrt(1.0 + EPS)        # gamma / sqrt(var + eps)
    w = w * bn_scale                             # fold BN scale into weights
    bias = jnp.zeros((cout,), jnp.float32)       # beta - mean * scale = 0
    K = kh * kw * cin
    Kp = _round_up(K, 128)
    if Kp != K:
        w = jnp.pad(w, ((0, Kp - K), (0, 0)))
    return {"w": w.astype(jnp.bfloat16), "b": bias, "kh": kh, "kw": kw}


def init_params(key):
    keys = iter(jax.random.split(key, 64))
    p = {"conv1": make_conv(next(keys), 7, 7, 3, 64)}
    layers = []
    inplanes = 64
    for planes, stride in [(64, 1), (128, 2), (256, 2), (512, 2)]:
        blocks = []
        for b in range(2):                       # layers = [2, 2, 2, 2]
            s = stride if b == 0 else 1
            blk = {"stride": s,
                   "conv1": make_conv(next(keys), 3, 3, inplanes, planes),
                   "conv2": make_conv(next(keys), 3, 3, planes, planes)}
            if s != 1 or inplanes != planes:     # downsample branch
                blk["down"] = make_conv(next(keys), 1, 1, inplanes, planes)
            inplanes = planes
            blocks.append(blk)
        layers.append(blocks)
    p["layers"] = layers
    return p


# -----------------------------------------------------------------------------
# Forward pass
# -----------------------------------------------------------------------------
def basic_block(x, blk):
    identity = x
    out = conv_bn(x, blk["conv1"], blk["stride"], 1, apply_relu=True)
    if "down" in blk:
        identity = conv_bn(x, blk["down"], blk["stride"], 0, apply_relu=False)
    out = conv_bn(out, blk["conv2"], 1, 1, residual=identity, apply_relu=True)
    return out


def resnet_forward(params, x_nchw, depth_nchw):
    x = jnp.transpose(x_nchw, (0, 2, 3, 1))                  # NCHW -> NHWC
    x = conv_bn(x, params["conv1"], 2, 3, apply_relu=True)
    x = maxpool_3x3_s2(x)

    # TODO(synk): `output_0` is an undefined name in the reference forward
    # (NameError in PyTorch); we define it analogously to output_1 as
    # sigmoid(nearest-interpolated depth) at x's post-maxpool resolution.
    d0 = nearest_resize_nchw_to_nhwc(depth_nchw, x.shape[1], x.shape[2])
    output_0 = jax.nn.sigmoid(d0)
    x = sigmoid_gate(x, d0)                                   # x + x*output_0
    for blk in params["layers"][0]:
        x = basic_block(x, blk)

    # Reference hardcodes F.interpolate(depth, size=[64, 48]) for a 512x384
    # input; at these small test shapes the equivalent target is x's spatial.
    d1 = nearest_resize_nchw_to_nhwc(depth_nchw, x.shape[1], x.shape[2])
    x = sigmoid_gate(x, d1)                                   # x + x*output_1
    for blk in params["layers"][1]:
        x = basic_block(x, blk)
    for blk in params["layers"][2]:
        x = basic_block(x, blk)
    for blk in params["layers"][3]:
        x = basic_block(x, blk)

    x_out = jnp.transpose(x, (0, 3, 1, 2))                    # back to NCHW
    output_0_nchw = jnp.transpose(output_0, (0, 3, 1, 2))
    return x_out, output_0_nchw


if __name__ == "__main__":
    key = jax.random.PRNGKey(0)
    kp, kx, kd = jax.random.split(key, 3)
    params = init_params(kp)

    # small shapes consistent with the forward (NCHW image + 1-channel depth)
    x = jax.random.normal(kx, (2, 3, 64, 48), dtype=jnp.float32)
    depth = jax.random.normal(kd, (2, 1, 16, 16), dtype=jnp.float32)

    out, out0 = resnet_forward(params, x, depth)
    jax.block_until_ready((out, out0))

    assert out.shape == (2, 512, 2, 2), out.shape
    assert out0.shape == (2, 1, 16, 12), out0.shape
    assert bool(jnp.all(jnp.isfinite(out))) and bool(jnp.all(jnp.isfinite(out0)))
    print("KERNEL_OK")
</pallas_src>

<mosaic_0001>
module attributes {stable_mosaic.version = 11 : i64} {
  func.func @_conv_mm_kernel(%arg0: i32, %arg1: i32, %arg2: memref<512x256xbf16, #tpu.memory_space<vmem>>, %arg3: memref<256x64xbf16, #tpu.memory_space<vmem>>, %arg4: memref<1x64xf32, #tpu.memory_space<vmem>>, %arg5: memref<512x64xf32, #tpu.memory_space<vmem>>) attributes {dimension_semantics = [#tpu.dimension_semantics<parallel>, #tpu.dimension_semantics<parallel>], iteration_bounds = array<i64: 3, 1>, scalar_prefetch = 0 : i64, scratch_operands = 0 : i64, tpu.core_type = #tpu.core_type<tc>, window_params = [{transform_indices = @transform_0, window_bounds = array<i64: 512, 256>}, {transform_indices = @transform_1, window_bounds = array<i64: 256, 64>}, {transform_indices = @transform_2, window_bounds = array<i64: 1, 64>}, {transform_indices = @transform_3, window_bounds = array<i64: 512, 64>}]} {
    %c0 = arith.constant 0 : index
    %c0_0 = arith.constant 0 : index
    %0 = vector.load %arg2[%c0, %c0_0] : memref<512x256xbf16, #tpu.memory_space<vmem>>, vector<512x256xbf16>
    %c0_1 = arith.constant 0 : index
    %c0_2 = arith.constant 0 : index
    %1 = vector.load %arg3[%c0_1, %c0_2] : memref<256x64xbf16, #tpu.memory_space<vmem>>, vector<256x64xbf16>
    %cst = arith.constant dense<0.000000e+00> : vector<512x64xf32>
    %2 = tpu.matmul %0, %1, %cst {dimension_numbers = #tpu.dot_dimension_numbers<[1], [0], [0], [1], [0, 0, 1, 1], [], []>} : vector<512x256xbf16>, vector<256x64xbf16>, vector<512x64xf32> -> vector<512x64xf32>
    %c0_3 = arith.constant 0 : index
    %c0_4 = arith.constant 0 : index
    %3 = vector.load %arg4[%c0_3, %c0_4] : memref<1x64xf32, #tpu.memory_space<vmem>>, vector<1x64xf32>
    %4 = vector.broadcast %3 : vector<1x64xf32> to vector<512x64xf32>
    %5 = arith.addf %2, %4 : vector<512x64xf32>
    %cst_5 = arith.constant 0.000000e+00 : f32
    %6 = vector.broadcast %cst_5 : f32 to vector<512x64xf32>
    %7 = arith.maximumf %5, %6 : vector<512x64xf32>
    %c0_6 = arith.constant 0 : index
    %c0_7 = arith.constant 0 : index
    %8 = vector.load %arg5[%c0_6, %c0_7] : memref<512x64xf32, #tpu.memory_space<vmem>>, vector<512x64xf32>
    tpu.vector_store %arg5[%c0_6, %c0_7], %7 {strides = array<i32>} : memref<512x64xf32, #tpu.memory_space<vmem>>, vector<512x64xf32>,
    return
  }
  func.func @transform_0(%arg0: i32, %arg1: i32) -> (i32, i32) {
    %c0_i32 = arith.constant 0 : i32
    %c0_i32_0 = arith.constant 0 : i32
    return %arg0, %c0_i32 : i32, i32
  }
  func.func @transform_1(%arg0: i32, %arg1: i32) -> (i32, i32) {
    %c0_i32 = arith.constant 0 : i32
    %c0_i32_0 = arith.constant 0 : i32
    return %c0_i32, %arg1 : i32, i32
  }
  func.func @transform_2(%arg0: i32, %arg1: i32) -> (i32, i32) {
    %c0_i32 = arith.constant 0 : i32
    %c0_i32_0 = arith.constant 0 : i32
    return %c0_i32, %arg1 : i32, i32
  }
  func.func @transform_3(%arg0: i32, %arg1: i32) -> (i32, i32) {
    %c0_i32 = arith.constant 0 : i32
    return %arg0, %arg1 : i32, i32
  }
}

</mosaic_0001>

<llo_original>
// kernel: tpu_custom_call.1
$region0: #{tpu_custom_call.1}
  #allocation0 [shape = 'u32[]', space=smem, size = 0x4, offset = 0x4, fixed_abs, tag = 'smem constant byte address 0x4 - core index']
  #allocation1 [shape = 'u32[144,128]{1,0:T(1,128)}', space=vmem, size = 0x12000, scoped, tag = 'internal scratch']
  %s0 = inlined_call_operand.hbm [shape: bf16[1536,256], index: 0, kind: input, shape index: {}]
  %s1 = inlined_call_operand.vmem [shape: bf16[256,64], index: 1, kind: input, shape index: {}]
  %s2 = inlined_call_operand.vmem [shape: f32[1,64], index: 2, kind: input, shape index: {}]
  %s3 = inlined_call_operand.vmem [shape: f32[1536,64], index: 3, kind: output, shape index: {}]
  %s4 = sld [smem:[#allocation0]]
  $region49: #{tpu_custom_call.1} parent=0
    _
  %s6 = ssub.s32 1, %s4
  %s7 = scalar_select 0, %s6, %s4
  $region1: #{tpu_custom_call.1} parent=0
    #allocation2 [shape = 'u8[524288]{0}', space=vmem, size = 0x80000, scoped, tag = 'input window, operand 0']
    #allocation3 [shape = 's32[2]{0}', space=sflag, size = 0x8, scoped, tag = 'scoped memory for tpu_custom_call.1']
    %8 = vsyncpa [#allocation3], 0
    %s9 = scalar_lea.sflag [#allocation3], 1
    %10 = vsyncpa %s9, 0
    loop: start=0, step=1, limit=5
    $region2: #{tpu_custom_call.1} parent=1 // loop_pre_header
      _
    $region3: #{tpu_custom_call.1} parent=1 // loop_header
      %s12 = sphi 0, %s16
      %p13 = scmp.ge.s32.totalorder %s12, 5
      %s19 = sphi 0, %s31
      %s20 = sphi 0, %s27
      %s21 = sphi 0, %s19
      %s22 = sphi 0, %s20
      %s23 = sphi 0, %s21
      %s24 = sphi 0, %s22
      %s34 = sphi 0, %s36
      %s37 = sphi 0, %s34
      %s38 = sphi 0, %s37
      %s54 = sphi 0, %s38
      %s60 = sphi 0, %s62
      %s63 = sphi 0, %s60
      %s64 = sphi 0, %s63
      %s80 = sphi 0, %s64
      %s86 = sphi 0, %s88
      %s89 = sphi 0, %s86
      %s90 = sphi 0, %s89
      %s106 = sphi 0, %s90
      %s114 = sphi 0, %s116
      %s117 = sphi 0, %s114
      %s118 = sphi 0, %s117
      %s134 = sphi 0, %s118
    $region4: #{tpu_custom_call.1} parent=1 // loop_header_branch
      %15 = sbr.rel (%p13) target = $region8
    $region5: #{tpu_custom_call.1} parent=1 // loop_body
      %s17 = ssub.s32 %s12, 1
      %s18 = ssub.s32 %s12, 2
      %s25 = sadd.s32 1, %s20
      %p26 = scmp.ge.s32.totalorder %s25, 1
      %s27 = scalar_select %p26, 0, %s25
      %s28 = sadd.s32 1, %s19
      %s29 = scalar_select %p26, %s28, %s19
      %p30 = scmp.ge.s32.totalorder %s29, 3
      %s31 = scalar_select %p30, 0, %s29
      %s32 = ssub.s32 %s19, %s31
      %p33 = scmp.eq.s32.totalorder %s32, 0
      %s35 = sadd.s32 %s34, 1
      %s36 = scalar_select %p33, %s34, %s35
      %p39 = pneg %p33
      %p40 = scmp.eq.s32.totalorder %s12, 2
      %p41 = por %p39, %p40
      %p42 = scmp.ne.s32.totalorder %s34, %s37
      %p43 = scmp.eq.s32.totalorder %s12, 0
      %p44 = por %p42, %p43
      %p45 = scmp.ne.s32.totalorder %s34, %s37
      %p46 = scmp.eq.s32.totalorder %s17, 2
      %p47 = por %p45, %p46
      %p48 = scmp.ne.s32.totalorder %s37, %s38
      %p49 = scmp.eq.s32.totalorder %s17, 0
      %p50 = por %p48, %p49
      %p51 = scmp.ne.s32.totalorder %s37, %s38
      %p52 = scmp.eq.s32.totalorder %s18, 2
      %p53 = por %p51, %p52
      %p55 = scmp.ne.s32.totalorder %s38, %s54
      %p56 = scmp.eq.s32.totalorder %s18, 0
      %p57 = por %p55, %p56
      %s58 = ssub.s32 %s20, %s27
      %p59 = scmp.eq.s32.totalorder %s58, 0
      %s61 = sadd.s32 %s60, 1
      %s62 = scalar_select %p59, %s60, %s61
      %p65 = pneg %p59
      %p66 = scmp.eq.s32.totalorder %s12, 2
      %p67 = por %p65, %p66
      %p68 = scmp.ne.s32.totalorder %s60, %s63
      %p69 = scmp.eq.s32.totalorder %s12, 0
      %p70 = por %p68, %p69
      %p71 = scmp.ne.s32.totalorder %s60, %s63
      %p72 = scmp.eq.s32.totalorder %s17, 2
      %p73 = por %p71, %p72
      %p74 = scmp.ne.s32.totalorder %s63, %s64
      %p75 = scmp.eq.s32.totalorder %s17, 0
      %p76 = por %p74, %p75
      %p77 = scmp.ne.s32.totalorder %s63, %s64
      %p78 = scmp.eq.s32.totalorder %s18, 2
      %p79 = por %p77, %p78
      %p81 = scmp.ne.s32.totalorder %s64, %s80
      %p82 = scmp.eq.s32.totalorder %s18, 0
      %p83 = por %p81, %p82
      %s84 = ssub.s32 %s20, %s27
      %p85 = scmp.eq.s32.totalorder %s84, 0
      %s87 = sadd.s32 %s86, 1
      %s88 = scalar_select %p85, %s86, %s87
      %p91 = pneg %p85
      %p92 = scmp.eq.s32.totalorder %s12, 2
      %p93 = por %p91, %p92
      %p94 = scmp.ne.s32.totalorder %s86, %s89
      %p95 = scmp.eq.s32.totalorder %s12, 0
      %p96 = por %p94, %p95
      %p97 = scmp.ne.s32.totalorder %s86, %s89
      %p98 = scmp.eq.s32.totalorder %s17, 2
      %p99 = por %p97, %p98
      %p100 = scmp.ne.s32.totalorder %s89, %s90
      %p101 = scmp.eq.s32.totalorder %s17, 0
      %p102 = por %p100, %p101
      %p103 = scmp.ne.s32.totalorder %s89, %s90
      %p104 = scmp.eq.s32.totalorder %s18, 2
      %p105 = por %p103, %p104
      %p107 = scmp.ne.s32.totalorder %s90, %s106
      %p108 = scmp.eq.s32.totalorder %s18, 0
      %p109 = por %p107, %p108
      %s110 = ssub.s32 %s19, %s31
      %s111 = ssub.s32 %s20, %s27
      %s112 = sor.u32 %s110, %s111
      %p113 = scmp.eq.s32.totalorder %s112, 0
      %s115 = sadd.s32 %s114, 1
      %s116 = scalar_select %p113, %s114, %s115
      %p119 = pneg %p113
      %p120 = scmp.eq.s32.totalorder %s12, 2
      %p121 = por %p119, %p120
      %p122 = scmp.ne.s32.totalorder %s114, %s117
      %p123 = scmp.eq.s32.totalorder %s12, 0
      %p124 = por %p122, %p123
      %p125 = scmp.ne.s32.totalorder %s114, %s117
      %p126 = scmp.eq.s32.totalorder %s17, 2
      %p127 = por %p125, %p126
      %p128 = scmp.ne.s32.totalorder %s117, %s118
      %p129 = scmp.eq.s32.totalorder %s17, 0
      %p130 = por %p128, %p129
      %p131 = scmp.ne.s32.totalorder %s117, %s118
      %p132 = scmp.eq.s32.totalorder %s18, 2
      %p133 = por %p131, %p132
      %p135 = scmp.ne.s32.totalorder %s118, %s134
      %p136 = scmp.eq.s32.totalorder %s18, 0
      %p137 = por %p135, %p136
      %p138 = scmp.le.s32.totalorder 1, %s12
      %p139 = scmp.lt.s32.totalorder %s12, 4
      %p140 = pnand %p138, %p139
      %p141 = pneg %p140
      // Predicated region
      $region9: #{tpu_custom_call.1} parent=5 // pred_check
        _
      $region10: #{tpu_custom_call.1} parent=5 // pred_check_branch
        %143 = sbr.rel (%p140) target = $region12
      $region11: #{tpu_custom_call.1} parent=5 // pred_region
        %s144 = ssub.s32 %s12, 1
        // Predicated region
        $region13: #{tpu_custom_call.1} parent=11 // pred_check
          %p145 = pneg %p76
        $region14: #{tpu_custom_call.1} parent=11 // pred_check_branch
          %147 = sbr.rel (%p145) target = $region16
        $region15: #{tpu_custom_call.1} parent=11 // pred_region
          %p148 = scmp.lt.s32.totalorder %s22, 0
          %s149 = scalar_select %p148, %s22, 0
          %s150 = smul.addr %s149, 4
          %s151 = scalar_lea.vmem %s1, %s150
        $region16: #{tpu_custom_call.1} parent=11 // pred_fallthru
          _
        // Predicated region
        $region17: #{tpu_custom_call.1} parent=11 // pred_check
          %p152 = pneg %p102
        $region18: #{tpu_custom_call.1} parent=11 // pred_check_branch
          %154 = sbr.rel (%p152) target = $region20
        $region19: #{tpu_custom_call.1} parent=11 // pred_region
          %p155 = scmp.lt.s32.totalorder %s22, 0
          %s156 = scalar_select %p155, %s22, 0
          %s157 = scalar_lea.vmem %s2, %s156
        $region20: #{tpu_custom_call.1} parent=11 // pred_fallthru
          _
      $region12: #{tpu_custom_call.1} parent=5 // pred_fallthru
        _
      %p158 = scmp.lt.s32.totalorder %s12, 3
      // Predicated region
      $region21: #{tpu_custom_call.1} parent=5 // pred_check
        %p159 = pneg %p158
      $region22: #{tpu_custom_call.1} parent=5 // pred_check_branch
        %161 = sbr.rel (%p159) target = $region24
      $region23: #{tpu_custom_call.1} parent=5 // pred_region
        // Predicated region
        $region25: #{tpu_custom_call.1} parent=23 // pred_check
          %p162 = pneg %p44
        $region26: #{tpu_custom_call.1} parent=23 // pred_check_branch
          %164 = sbr.rel (%p162) target = $region28
        $region27: #{tpu_custom_call.1} parent=23 // pred_region
          %s165 = sand.u32 %s34, 1
          %s166 = scalar_lea.sflag [#allocation3], %s165
          %s167 = sand.u32 %s34, 1
          %s168 = smul.addr %s167, 512
          %s169 = scalar_lea.vmem [#allocation2], %s168
          %s170 = smul.u32 64, %s19
          %s172 = ssub.s32 8192, 8192
          %173 = vsyncadd %s166, %s172
          %s174 = smul.addr %s170, 2
          %s175 = smul.addr %s174, 64
          %s176 = scalar_lea.hbm %s0, %s175
          %s177 = sshll.u32 %s169, 4
          %s178 = int_to_ptr.vmem [resolvable:$true] %s177
          %183 = dma.hbm_to_vmem [thread:$0]  %s176, 8192, %s178, %s166, 128, 128, 8
        $region28: #{tpu_custom_call.1} parent=23 // pred_fallthru
          _
      $region24: #{tpu_custom_call.1} parent=5 // pred_fallthru
        _
      %p184 = scmp.le.s32.totalorder 1, %s12
      %p185 = scmp.lt.s32.totalorder %s12, 4
      %p186 = pnand %p184, %p185
      %p187 = pneg %p186
      // Predicated region
      $region29: #{tpu_custom_call.1} parent=5 // pred_check
        _
      $region30: #{tpu_custom_call.1} parent=5 // pred_check_branch
        %189 = sbr.rel (%p186) target = $region32
      $region31: #{tpu_custom_call.1} parent=5 // pred_region
        %s190 = ssub.s32 %s12, 1
        %s191 = sand.u32 %s37, 1
        %s192 = scalar_lea.sflag [#allocation3], %s191
        %s193 = sand.u32 %s37, 1
        %s194 = smul.addr %s193, 512
        %s195 = scalar_lea.vmem [#allocation2], %s194
        // Predicated region
        $region33: #{tpu_custom_call.1} parent=31 // pred_check
          %p196 = pneg %p50
        $region34: #{tpu_custom_call.1} parent=31 // pred_check_branch
          %198 = sbr.rel (%p196) target = $region36
        $region35: #{tpu_custom_call.1} parent=31 // pred_region
          %199 = dma.done %s192, 8192
        $region36: #{tpu_custom_call.1} parent=31 // pred_fallthru
          _
        %s200 = sand.u32 %s37, 1
        %s201 = scalar_lea.sflag [#allocation3], %s200
        %s202 = sand.u32 %s37, 1
        %s203 = smul.addr %s202, 512
        %s204 = scalar_lea.vmem [#allocation2], %s203
        %p205 = pneg %p50
        %p206 = pneg %p47
        %p207 = scmp.lt.s32.totalorder %s22, 0
        %s208 = scalar_select %p207, %s22, 0
        %s209 = smul.addr %s208, 4
        %s210 = scalar_lea.vmem %s1, %s209
        %p211 = pneg %p76
        %p212 = pneg %p73
        %p213 = scmp.lt.s32.totalorder %s22, 0
        %s214 = scalar_select %p213, %s22, 0
        %s215 = scalar_lea.vmem %s2, %s214
        %p216 = pneg %p102
        %p217 = pneg %p99
        %p218 = pneg %p130
        %p219 = pneg %p127
        %s220 = smul.u32 64, %s21
        %p221 = scmp.lt.s32.totalorder %s220, 191
        %s222 = scalar_select %p221, %s220, 191
        %p223 = scmp.lt.s32.totalorder %s22, 0
        %s224 = scalar_select %p223, %s22, 0
        %s225 = sadd.s32 %s224, %s222
        %s226 = smul.addr %s225, 8
        %s227 = scalar_lea.vmem %s3, %s226
        %s228 = smul.u32 64, %s21
        %p229 = scmp.lt.s32.totalorder %s22, 0
        %s230 = scalar_select %p229, %s22, 0
        %s231 = smul.addr %s230, 4
        %s232 = scalar_lea.vmem %s1, %s231
        %p233 = scmp.lt.s32.totalorder %s22, 0
        %s234 = scalar_select %p233, %s22, 0
        %s235 = scalar_lea.vmem %s2, %s234
        %s236 = smul.u32 64, %s21
        %p237 = scmp.lt.s32.totalorder %s236, 191
        %s238 = scalar_select %p237, %s236, 191
        %p239 = scmp.lt.s32.totalorder %s22, 0
        %s240 = scalar_select %p239, %s22, 0
        %s241 = sadd.s32 %s240, %s238
        %s242 = smul.addr %s241, 8
        %s243 = scalar_lea.vmem %s3, %s242
        %s244 = smul.u32 64, %s21
        %v246 = vld [vmem:[%s195] sm:$0xff]
        %v247 = vld [vmem:[%s195 + $0x8] sm:$0xff]
        %v248 = vld [vmem:[%s195 + $0x10] sm:$0xff]
        %v249 = vld [vmem:[%s195 + $0x18] sm:$0xff]
        %v250 = vld [vmem:[%s195 + $0x20] sm:$0xff]
        %v251 = vld [vmem:[%s195 + $0x28] sm:$0xff]
        %v252 = vld [vmem:[%s195 + $0x30] sm:$0xff]
        %v253 = vld [vmem:[%s195 + $0x38] sm:$0xff]
        %v254 = vld [vmem:[%s195 + $0x40] sm:$0xff]
        %v255 = vld [vmem:[%s195 + $0x48] sm:$0xff]
        %v256 = vld [vmem:[%s195 + $0x50] sm:$0xff]
        %v257 = vld [vmem:[%s195 + $0x58] sm:$0xff]
        %v258 = vld [vmem:[%s195 + $0x60] sm:$0xff]
        %v259 = vld [vmem:[%s195 + $0x68] sm:$0xff]
        %v260 = vld [vmem:[%s195 + $0x70] sm:$0xff]
        %v261 = vld [vmem:[%s195 + $0x78] sm:$0xff]
        %v262 = vld [vmem:[%s195 + $0x80] sm:$0xff]
        %v263 = vld [vmem:[%s195 + $0x88] sm:$0xff]
        %v264 = vld [vmem:[%s195 + $0x90] sm:$0xff]
        %v265 = vld [vmem:[%s195 + $0x98] sm:$0xff]
        %v266 = vld [vmem:[%s195 + $0xa0] sm:$0xff]
        %v267 = vld [vmem:[%s195 + $0xa8] sm:$0xff]
        %v268 = vld [vmem:[%s195 + $0xb0] sm:$0xff]
        %v269 = vld [vmem:[%s195 + $0xb8] sm:$0xff]
        %v270 = vld [vmem:[%s195 + $0xc0] sm:$0xff]
        %v271 = vld [vmem:[%s195 + $0xc8] sm:$0xff]
        %v272 = vld [vmem:[%s195 + $0xd0] sm:$0xff]
        %v273 = vld [vmem:[%s195 + $0xd8] sm:$0xff]
        %v274 = vld [vmem:[%s195 + $0xe0] sm:$0xff]
        %v275 = vld [vmem:[%s195 + $0xe8] sm:$0xff]
        %v276 = vld [vmem:[%s195 + $0xf0] sm:$0xff]
        %v277 = vld [vmem:[%s195 + $0xf8] sm:$0xff]
        %v278 = vld [vmem:[%s195 + $0x100] sm:$0xff]
        %v279 = vld [vmem:[%s195 + $0x108] sm:$0xff]
        %v280 = vld [vmem:[%s195 + $0x110] sm:$0xff]
        %v281 = vld [vmem:[%s195 + $0x118] sm:$0xff]
        %v282 = vld [vmem:[%s195 + $0x120] sm:$0xff]
        %v283 = vld [vmem:[%s195 + $0x128] sm:$0xff]
        %v284 = vld [vmem:[%s195 + $0x130] sm:$0xff]
        %v285 = vld [vmem:[%s195 + $0x138] sm:$0xff]
        %v286 = vld [vmem:[%s195 + $0x140] sm:$0xff]
        %v287 = vld [vmem:[%s195 + $0x148] sm:$0xff]
        %v288 = vld [vmem:[%s195 + $0x150] sm:$0xff]
        %v289 = vld [vmem:[%s195 + $0x158] sm:$0xff]
        %v290 = vld [vmem:[%s195 + $0x160] sm:$0xff]
        %v291 = vld [vmem:[%s195 + $0x168] sm:$0xff]
        %v292 = vld [vmem:[%s195 + $0x170] sm:$0xff]
        %v293 = vld [vmem:[%s195 + $0x178] sm:$0xff]
        %v294 = vld [vmem:[%s195 + $0x180] sm:$0xff]
        %v295 = vld [vmem:[%s195 + $0x188] sm:$0xff]
        %v296 = vld [vmem:[%s195 + $0x190] sm:$0xff]
        %v297 = vld [vmem:[%s195 + $0x198] sm:$0xff]
        %v298 = vld [vmem:[%s195 + $0x1a0] sm:$0xff]
        %v299 = vld [vmem:[%s195 + $0x1a8] sm:$0xff]
        %v300 = vld [vmem:[%s195 + $0x1b0] sm:$0xff]
        %v301 = vld [vmem:[%s195 + $0x1b8] sm:$0xff]
        %v302 = vld [vmem:[%s195 + $0x1c0] sm:$0xff]
        %v303 = vld [vmem:[%s195 + $0x1c8] sm:$0xff]
        %v304 = vld [vmem:[%s195 + $0x1d0] sm:$0xff]
        %v305 = vld [vmem:[%s195 + $0x1d8] sm:$0xff]
        %v306 = vld [vmem:[%s195 + $0x1e0] sm:$0xff]
        %v307 = vld [vmem:[%s195 + $0x1e8] sm:$0xff]
        %v308 = vld [vmem:[%s195 + $0x1f0] sm:$0xff]
        %v309 = vld [vmem:[%s195 + $0x1f8] sm:$0xff]
        %v310 = vld [vmem:[%s232] sm:$0xf]
        %v311 = vld [vmem:[%s232 + $0x4] sm:$0xf]
        %v312 = vld [vmem:[%s232 + $0x8] sm:$0xf]
        %v313 = vld [vmem:[%s232 + $0xc] sm:$0xf]
        %v314 = vld [vmem:[%s232 + $0x10] sm:$0xf]
        %v315 = vld [vmem:[%s232 + $0x14] sm:$0xf]
        %v316 = vld [vmem:[%s232 + $0x18] sm:$0xf]
        %v317 = vld [vmem:[%s232 + $0x1c] sm:$0xf]
        %v318 = vld [vmem:[%s232 + $0x20] sm:$0xf]
        %v319 = vld [vmem:[%s232 + $0x24] sm:$0xf]
        %v320 = vld [vmem:[%s232 + $0x28] sm:$0xf]
        %v321 = vld [vmem:[%s232 + $0x2c] sm:$0xf]
        %v322 = vld [vmem:[%s232 + $0x30] sm:$0xf]
        %v323 = vld [vmem:[%s232 + $0x34] sm:$0xf]
        %v324 = vld [vmem:[%s232 + $0x38] sm:$0xf]
        %v325 = vld [vmem:[%s232 + $0x3c] sm:$0xf]
        %v326 = vld [vmem:[%s232 + $0x40] sm:$0xf]
        %v327 = vld [vmem:[%s232 + $0x44] sm:$0xf]
        %v328 = vld [vmem:[%s232 + $0x48] sm:$0xf]
        %v329 = vld [vmem:[%s232 + $0x4c] sm:$0xf]
        %v330 = vld [vmem:[%s232 + $0x50] sm:$0xf]
        %v331 = vld [vmem:[%s232 + $0x54] sm:$0xf]
        %v332 = vld [vmem:[%s232 + $0x58] sm:$0xf]
        %v333 = vld [vmem:[%s232 + $0x5c] sm:$0xf]
        %v334 = vld [vmem:[%s232 + $0x60] sm:$0xf]
        %v335 = vld [vmem:[%s232 + $0x64] sm:$0xf]
        %v336 = vld [vmem:[%s232 + $0x68] sm:$0xf]
        %v337 = vld [vmem:[%s232 + $0x6c] sm:$0xf]
        %v338 = vld [vmem:[%s232 + $0x70] sm:$0xf]
        %v339 = vld [vmem:[%s232 + $0x74] sm:$0xf]
        %v340 = vld [vmem:[%s232 + $0x78] sm:$0xf]
        %v341 = vld [vmem:[%s232 + $0x7c] sm:$0xf]
        %v342 = vld [vmem:[%s235] sm:$0x1]
        %v344 = vlaneseq
        %v345 = vshrl.u32 %v344, 7
        %v346 = vsub.s32 0, %v345
        %v347 = vrot.slane %v342, %v346
        %v413 = vunpack.c.l.b16 %v246
        %v414 = vunpack.c.h.b16 %v246
        %v415 = vunpack.c.l.b16 %v247
        %v416 = vunpack.c.h.b16 %v247
        %v417 = vunpack.c.l.b16 %v248
        %v418 = vunpack.c.h.b16 %v248
        %v419 = vunpack.c.l.b16 %v249
        %v420 = vunpack.c.h.b16 %v249
        %v421 = vunpack.c.l.b16 %v250
        %v422 = vunpack.c.h.b16 %v250
        %v423 = vunpack.c.l.b16 %v251
        %v424 = vunpack.c.h.b16 %v251
        %v425 = vunpack.c.l.b16 %v252
        %v426 = vunpack.c.h.b16 %v252
        %v427 = vunpack.c.l.b16 %v253
        %v428 = vunpack.c.h.b16 %v253
        %v429 = vunpack.c.l.b16 %v254
        %v430 = vunpack.c.h.b16 %v254
        %v431 = vunpack.c.l.b16 %v255
        %v432 = vunpack.c.h.b16 %v255
        %v433 = vunpack.c.l.b16 %v256
        %v434 = vunpack.c.h.b16 %v256
        %v435 = vunpack.c.l.b16 %v257
        %v436 = vunpack.c.h.b16 %v257
        %v437 = vunpack.c.l.b16 %v258
        %v438 = vunpack.c.h.b16 %v258
        %v439 = vunpack.c.l.b16 %v259
        %v440 = vunpack.c.h.b16 %v259
        %v441 = vunpack.c.l.b16 %v260
        %v442 = vunpack.c.h.b16 %v260
        %v443 = vunpack.c.l.b16 %v261
        %v444 = vunpack.c.h.b16 %v261
        %v445 = vunpack.c.l.b16 %v262
        %v446 = vunpack.c.h.b16 %v262
        %v447 = vunpack.c.l.b16 %v263
        %v448 = vunpack.c.h.b16 %v263
        %v449 = vunpack.c.l.b16 %v264
        %v450 = vunpack.c.h.b16 %v264
        %v451 = vunpack.c.l.b16 %v265
        %v452 = vunpack.c.h.b16 %v265
        %v453 = vunpack.c.l.b16 %v266
        %v454 = vunpack.c.h.b16 %v266
        %v455 = vunpack.c.l.b16 %v267
        %v456 = vunpack.c.h.b16 %v267
        %v457 = vunpack.c.l.b16 %v268
        %v458 = vunpack.c.h.b16 %v268
        %v459 = vunpack.c.l.b16 %v269
        %v460 = vunpack.c.h.b16 %v269
        %v461 = vunpack.c.l.b16 %v270
        %v462 = vunpack.c.h.b16 %v270
        %v463 = vunpack.c.l.b16 %v271
        %v464 = vunpack.c.h.b16 %v271
        %v465 = vunpack.c.l.b16 %v272
        %v466 = vunpack.c.h.b16 %v272
        %v467 = vunpack.c.l.b16 %v273
        %v468 = vunpack.c.h.b16 %v273
        %v469 = vunpack.c.l.b16 %v274
        %v470 = vunpack.c.h.b16 %v274
        %v471 = vunpack.c.l.b16 %v275
        %v472 = vunpack.c.h.b16 %v275
        %v473 = vunpack.c.l.b16 %v276
        %v474 = vunpack.c.h.b16 %v276
        %v475 = vunpack.c.l.b16 %v277
        %v476 = vunpack.c.h.b16 %v277
        %v477 = vunpack.c.l.b16 %v278
        %v478 = vunpack.c.h.b16 %v278
        %v479 = vunpack.c.l.b16 %v279
        %v480 = vunpack.c.h.b16 %v279
        %v481 = vunpack.c.l.b16 %v280
        %v482 = vunpack.c.h.b16 %v280
        %v483 = vunpack.c.l.b16 %v281
        %v484 = vunpack.c.h.b16 %v281
        %v485 = vunpack.c.l.b16 %v282
        %v486 = vunpack.c.h.b16 %v282
        %v487 = vunpack.c.l.b16 %v283
        %v488 = vunpack.c.h.b16 %v283
        %v489 = vunpack.c.l.b16 %v284
        %v490 = vunpack.c.h.b16 %v284
        %v491 = vunpack.c.l.b16 %v285
        %v492 = vunpack.c.h.b16 %v285
        %v493 = vunpack.c.l.b16 %v286
        %v494 = vunpack.c.h.b16 %v286
        %v495 = vunpack.c.l.b16 %v287
        %v496 = vunpack.c.h.b16 %v287
        %v497 = vunpack.c.l.b16 %v288
        %v498 = vunpack.c.h.b16 %v288
        %v499 = vunpack.c.l.b16 %v289
        %v500 = vunpack.c.h.b16 %v289
        %v501 = vunpack.c.l.b16 %v290
        %v502 = vunpack.c.h.b16 %v290
        %v503 = vunpack.c.l.b16 %v291
        %v504 = vunpack.c.h.b16 %v291
        %v505 = vunpack.c.l.b16 %v292
        %v506 = vunpack.c.h.b16 %v292
        %v507 = vunpack.c.l.b16 %v293
        %v508 = vunpack.c.h.b16 %v293
        %v509 = vunpack.c.l.b16 %v294
        %v510 = vunpack.c.h.b16 %v294
        %v511 = vunpack.c.l.b16 %v295
        %v512 = vunpack.c.h.b16 %v295
        %v513 = vunpack.c.l.b16 %v296
        %v514 = vunpack.c.h.b16 %v296
        %v515 = vunpack.c.l.b16 %v297
        %v516 = vunpack.c.h.b16 %v297
        %v517 = vunpack.c.l.b16 %v298
        %v518 = vunpack.c.h.b16 %v298
        %v519 = vunpack.c.l.b16 %v299
        %v520 = vunpack.c.h.b16 %v299
        %v521 = vunpack.c.l.b16 %v300
        %v522 = vunpack.c.h.b16 %v300
        %v523 = vunpack.c.l.b16 %v301
        %v524 = vunpack.c.h.b16 %v301
        %v525 = vunpack.c.l.b16 %v302
        %v526 = vunpack.c.h.b16 %v302
        %v527 = vunpack.c.l.b16 %v303
        %v528 = vunpack.c.h.b16 %v303
        %v529 = vunpack.c.l.b16 %v304
        %v530 = vunpack.c.h.b16 %v304
        %v531 = vunpack.c.l.b16 %v305
        %v532 = vunpack.c.h.b16 %v305
        %v533 = vunpack.c.l.b16 %v306
        %v534 = vunpack.c.h.b16 %v306
        %v535 = vunpack.c.l.b16 %v307
        %v536 = vunpack.c.h.b16 %v307
        %v537 = vunpack.c.l.b16 %v308
        %v538 = vunpack.c.h.b16 %v308
        %v539 = vunpack.c.l.b16 %v309
        %v540 = vunpack.c.h.b16 %v309
        %v541 = vpack.c.b16 %v415, %v413
        %v542 = vpack.c.b16 %v416, %v414
        %v543 = vpack.c.b16 %v419, %v417
        %v544 = vpack.c.b16 %v420, %v418
        %v545 = vpack.c.b16 %v423, %v421
        %v546 = vpack.c.b16 %v424, %v422
        %v547 = vpack.c.b16 %v427, %v425
        %v548 = vpack.c.b16 %v428, %v426
        %v549 = vpack.c.b16 %v431, %v429
        %v550 = vpack.c.b16 %v432, %v430
        %v551 = vpack.c.b16 %v435, %v433
        %v552 = vpack.c.b16 %v436, %v434
        %v553 = vpack.c.b16 %v439, %v437
        %v554 = vpack.c.b16 %v440, %v438
        %v555 = vpack.c.b16 %v443, %v441
        %v556 = vpack.c.b16 %v444, %v442
        %v557 = vpack.c.b16 %v447, %v445
        %v558 = vpack.c.b16 %v448, %v446
        %v559 = vpack.c.b16 %v451, %v449
        %v560 = vpack.c.b16 %v452, %v450
        %v561 = vpack.c.b16 %v455, %v453
        %v562 = vpack.c.b16 %v456, %v454
        %v563 = vpack.c.b16 %v459, %v457
        %v564 = vpack.c.b16 %v460, %v458
        %v565 = vpack.c.b16 %v463, %v461
        %v566 = vpack.c.b16 %v464, %v462
        %v567 = vpack.c.b16 %v467, %v465
        %v568 = vpack.c.b16 %v468, %v466
        %v569 = vpack.c.b16 %v471, %v469
        %v570 = vpack.c.b16 %v472, %v470
        %v571 = vpack.c.b16 %v475, %v473
        %v572 = vpack.c.b16 %v476, %v474
        %v573 = vpack.c.b16 %v479, %v477
        %v574 = vpack.c.b16 %v480, %v478
        %v575 = vpack.c.b16 %v483, %v481
        %v576 = vpack.c.b16 %v484, %v482
        %v577 = vpack.c.b16 %v487, %v485
        %v578 = vpack.c.b16 %v488, %v486
        %v579 = vpack.c.b16 %v491, %v489
        %v580 = vpack.c.b16 %v492, %v490
        %v581 = vpack.c.b16 %v495, %v493
        %v582 = vpack.c.b16 %v496, %v494
        %v583 = vpack.c.b16 %v499, %v497
        %v584 = vpack.c.b16 %v500, %v498
        %v585 = vpack.c.b16 %v503, %v501
        %v586 = vpack.c.b16 %v504, %v502
        %v587 = vpack.c.b16 %v507, %v505
        %v588 = vpack.c.b16 %v508, %v506
        %v589 = vpack.c.b16 %v511, %v509
        %v590 = vpack.c.b16 %v512, %v510
        %v591 = vpack.c.b16 %v515, %v513
        %v592 = vpack.c.b16 %v516, %v514
        %v593 = vpack.c.b16 %v519, %v517
        %v594 = vpack.c.b16 %v520, %v518
        %v595 = vpack.c.b16 %v523, %v521
        %v596 = vpack.c.b16 %v524, %v522
        %v597 = vpack.c.b16 %v527, %v525
        %v598 = vpack.c.b16 %v528, %v526
        %v599 = vpack.c.b16 %v531, %v529
        %v600 = vpack.c.b16 %v532, %v530
        %v601 = vpack.c.b16 %v535, %v533
        %v602 = vpack.c.b16 %v536, %v534
        %v603 = vpack.c.b16 %v539, %v537
        %v604 = vpack.c.b16 %v540, %v538
        %v701 = vunpack.c.l.b16 %v310
        %v702 = vunpack.c.l.b16 %v311
        %v703 = vunpack.c.l.b16 %v312
        %v704 = vunpack.c.l.b16 %v313
        %v705 = vunpack.c.l.b16 %v314
        %v706 = vunpack.c.l.b16 %v315
        %v707 = vunpack.c.l.b16 %v316
        %v708 = vunpack.c.l.b16 %v317
        %v709 = vunpack.c.l.b16 %v318
        %v710 = vunpack.c.l.b16 %v319
        %v711 = vunpack.c.l.b16 %v320
        %v712 = vunpack.c.l.b16 %v321
        %v713 = vunpack.c.l.b16 %v322
        %v714 = vunpack.c.l.b16 %v323
        %v715 = vunpack.c.l.b16 %v324
        %v716 = vunpack.c.l.b16 %v325
        %v717 = vunpack.c.l.b16 %v326
        %v718 = vunpack.c.l.b16 %v327
        %v719 = vunpack.c.l.b16 %v328
        %v720 = vunpack.c.l.b16 %v329
        %v721 = vunpack.c.l.b16 %v330
        %v722 = vunpack.c.l.b16 %v331
        %v723 = vunpack.c.l.b16 %v332
        %v724 = vunpack.c.l.b16 %v333
        %v725 = vunpack.c.l.b16 %v334
        %v726 = vunpack.c.l.b16 %v335
        %v727 = vunpack.c.l.b16 %v336
        %v728 = vunpack.c.l.b16 %v337
        %v729 = vunpack.c.l.b16 %v338
        %v730 = vunpack.c.l.b16 %v339
        %v731 = vunpack.c.l.b16 %v340
        %v732 = vunpack.c.l.b16 %v341
        %v733 = vpack.c.b16 %v702, %v701
        %v734 = vpack.c.b16 %v704, %v703
        %v735 = vpack.c.b16 %v706, %v705
        %v736 = vpack.c.b16 %v708, %v707
        %v737 = vpack.c.b16 %v710, %v709
        %v738 = vpack.c.b16 %v712, %v711
        %v739 = vpack.c.b16 %v714, %v713
        %v740 = vpack.c.b16 %v716, %v715
        %v741 = vpack.c.b16 %v718, %v717
        %v742 = vpack.c.b16 %v720, %v719
        %v743 = vpack.c.b16 %v722, %v721
        %v744 = vpack.c.b16 %v724, %v723
        %v745 = vpack.c.b16 %v726, %v725
        %v746 = vpack.c.b16 %v728, %v727
        %v747 = vpack.c.b16 %v730, %v729
        %v748 = vpack.c.b16 %v732, %v731
        %765 = vmatprep.subr.bf16.mxu0 0
        %766 = vmatpush1.bf16.msra.mxu0 %v740
        %767 = vmatprep.subr.bf16.mxu0 0
        %768 = vmatpush1.bf16.msra.mxu0 %v739
        %769 = vmatprep.subr.bf16.mxu0 0
        %770 = vmatpush1.bf16.msra.mxu0 %v738
        %771 = vmatprep.subr.bf16.mxu0 0
        %772 = vmatpush1.bf16.msra.mxu0 %v737
        %773 = vmatprep.subr.bf16.mxu0 0
        %774 = vmatpush1.bf16.msra.mxu0 %v736
        %775 = vmatprep.subr.bf16.mxu0 0
        %776 = vmatpush1.bf16.msra.mxu0 %v735
        %777 = vmatprep.subr.bf16.mxu0 0
        %778 = vmatpush1.bf16.msra.mxu0 %v734
        %779 = vmatprep.subr.bf16.mxu0 0
        %780 = vmatpush1.bf16.msra.mxu0 %v733
        %781 = vmatprep.subr.bf16.mxu0 0
        %782 = vmatpush2.bf16.msra.mxu0 %v748
        %783 = vmatprep.subr.bf16.mxu0 0
        %784 = vmatpush2.bf16.msra.mxu0 %v747
        %785 = vmatprep.subr.bf16.mxu0 0
        %786 = vmatpush2.bf16.msra.mxu0 %v746
        %787 = vmatprep.subr.bf16.mxu0 0
        %788 = vmatpush2.bf16.msra.mxu0 %v745
        %789 = vmatprep.subr.bf16.mxu0 0
        %790 = vmatpush2.bf16.msra.mxu0 %v744
        %791 = vmatprep.subr.bf16.mxu0 0
        %792 = vmatpush2.bf16.msra.mxu0 %v743
        %793 = vmatprep.subr.bf16.mxu0 0
        %794 = vmatpush2.bf16.msra.mxu0 %v742
        %795 = vmatprep.subr.bf16.mxu0 0
        %796 = vmatpush2.bf16.msra.mxu0 %v741
        %797 = vmatprep.mubr.bf16.mxu0 %v542
        %798 = vmatmul.mubr.bf16.gmra.mxu0 %v541
        %v799 = vpop.f32.mrf.mxu0
        %v800 = vadd.f32 %v347, %v799
        %v801 = vpop.f32.mrf.mxu0
        %v802 = vpop.f32.mrf.mxu0
        %v803 = vadd.f32 %v347, %v802
        %v804 = vpop.f32.mrf.mxu0
        %805 = vmatprep.mubr.bf16.mxu0 %v544
        %806 = vmatmul.mubr.bf16.gmra.mxu0 %v543
        %v807 = vpop.f32.mrf.mxu0
        %v808 = vadd.f32 %v347, %v807
        %v809 = vpop.f32.mrf.mxu0
        %v810 = vpop.f32.mrf.mxu0
        %v811 = vadd.f32 %v347, %v810
        %v812 = vpop.f32.mrf.mxu0
        %813 = vmatprep.mubr.bf16.mxu0 %v546
        %814 = vmatmul.mubr.bf16.gmra.mxu0 %v545
        %v815 = vpop.f32.mrf.mxu0
        %v816 = vadd.f32 %v347, %v815
        %v817 = vpop.f32.mrf.mxu0
        %v818 = vpop.f32.mrf.mxu0
        %v819 = vadd.f32 %v347, %v818
        %v820 = vpop.f32.mrf.mxu0
        %821 = vmatprep.mubr.bf16.mxu0 %v548
        %822 = vmatmul.mubr.bf16.gmra.mxu0 %v547
        %v823 = vpop.f32.mrf.mxu0
        %v824 = vadd.f32 %v347, %v823
        %v825 = vpop.f32.mrf.mxu0
        %v826 = vpop.f32.mrf.mxu0
        %v827 = vadd.f32 %v347, %v826
        %v828 = vpop.f32.mrf.mxu0
        %829 = vmatprep.mubr.bf16.mxu0 %v550
        %830 = vmatmul.mubr.bf16.gmra.mxu0 %v549
        %v831 = vpop.f32.mrf.mxu0
        %v832 = vadd.f32 %v347, %v831
        %v833 = vpop.f32.mrf.mxu0
        %v834 = vpop.f32.mrf.mxu0
        %v835 = vadd.f32 %v347, %v834
        %v836 = vpop.f32.mrf.mxu0
        %837 = vmatprep.mubr.bf16.mxu0 %v552
        %838 = vmatmul.mubr.bf16.gmra.mxu0 %v551
        %v839 = vpop.f32.mrf.mxu0
        %v840 = vadd.f32 %v347, %v839
        %v841 = vpop.f32.mrf.mxu0
        %v842 = vpop.f32.mrf.mxu0
        %v843 = vadd.f32 %v347, %v842
        %v844 = vpop.f32.mrf.mxu0
        %845 = vmatprep.mubr.bf16.mxu0 %v554
        %846 = vmatmul.mubr.bf16.gmra.mxu0 %v553
        %v847 = vpop.f32.mrf.mxu0
        %v848 = vadd.f32 %v347, %v847
        %v849 = vpop.f32.mrf.mxu0
        %v850 = vpop.f32.mrf.mxu0
        %v851 = vadd.f32 %v347, %v850
        %v852 = vpop.f32.mrf.mxu0
        %853 = vmatprep.mubr.bf16.mxu0 %v556
        %854 = vmatmul.mubr.bf16.gmra.mxu0 %v555
        %v855 = vpop.f32.mrf.mxu0
        %v856 = vadd.f32 %v347, %v855
        %v857 = vpop.f32.mrf.mxu0
        %v858 = vpop.f32.mrf.mxu0
        %v859 = vadd.f32 %v347, %v858
        %v860 = vpop.f32.mrf.mxu0
        %861 = vmatprep.mubr.bf16.mxu0 %v558
        %862 = vmatmul.mubr.bf16.gmra.mxu0 %v557
        %v863 = vpop.f32.mrf.mxu0
        %v864 = vadd.f32 %v347, %v863
        %v865 = vpop.f32.mrf.mxu0
        %v866 = vpop.f32.mrf.mxu0
        %v867 = vadd.f32 %v347, %v866
        %v868 = vpop.f32.mrf.mxu0
        %869 = vmatprep.mubr.bf16.mxu0 %v560
        %870 = vmatmul.mubr.bf16.gmra.mxu0 %v559
        %v871 = vpop.f32.mrf.mxu0
        %v872 = vadd.f32 %v347, %v871
        %v873 = vpop.f32.mrf.mxu0
        %v874 = vpop.f32.mrf.mxu0
        %v875 = vadd.f32 %v347, %v874
        %v876 = vpop.f32.mrf.mxu0
        %877 = vmatprep.mubr.bf16.mxu0 %v562
        %878 = vmatmul.mubr.bf16.gmra.mxu0 %v561
        %v879 = vpop.f32.mrf.mxu0
        %v880 = vadd.f32 %v347, %v879
        %v881 = vpop.f32.mrf.mxu0
        %v882 = vpop.f32.mrf.mxu0
        %v883 = vadd.f32 %v347, %v882
        %v884 = vpop.f32.mrf.mxu0
        %885 = vmatprep.mubr.bf16.mxu0 %v564
        %886 = vmatmul.mubr.bf16.gmra.mxu0 %v563
        %v887 = vpop.f32.mrf.mxu0
        %v888 = vadd.f32 %v347, %v887
        %v889 = vpop.f32.mrf.mxu0
        %v890 = vpop.f32.mrf.mxu0
        %v891 = vadd.f32 %v347, %v890
        %v892 = vpop.f32.mrf.mxu0
        %893 = vmatprep.mubr.bf16.mxu0 %v566
        %894 = vmatmul.mubr.bf16.gmra.mxu0 %v565
        %v895 = vpop.f32.mrf.mxu0
        %v896 = vadd.f32 %v347, %v895
        %v897 = vpop.f32.mrf.mxu0
        %v898 = vpop.f32.mrf.mxu0
        %v899 = vadd.f32 %v347, %v898
        %v900 = vpop.f32.mrf.mxu0
        %901 = vmatprep.mubr.bf16.mxu0 %v568
        %902 = vmatmul.mubr.bf16.gmra.mxu0 %v567
        %v903 = vpop.f32.mrf.mxu0
        %v904 = vadd.f32 %v347, %v903
        %v905 = vpop.f32.mrf.mxu0
        %v906 = vpop.f32.mrf.mxu0
        %v907 = vadd.f32 %v347, %v906
        %v908 = vpop.f32.mrf.mxu0
        %909 = vmatprep.mubr.bf16.mxu0 %v570
        %910 = vmatmul.mubr.bf16.gmra.mxu0 %v569
        %v911 = vpop.f32.mrf.mxu0
        %v912 = vadd.f32 %v347, %v911
        %v913 = vpop.f32.mrf.mxu0
        %v914 = vpop.f32.mrf.mxu0
        %v915 = vadd.f32 %v347, %v914
        %v916 = vpop.f32.mrf.mxu0
        %917 = vmatprep.mubr.bf16.mxu0 %v572
        %918 = vmatmul.mubr.bf16.gmra.mxu0 %v571
        %v919 = vpop.f32.mrf.mxu0
        %v920 = vadd.f32 %v347, %v919
        %v921 = vpop.f32.mrf.mxu0
        %v922 = vpop.f32.mrf.mxu0
        %v923 = vadd.f32 %v347, %v922
        %v924 = vpop.f32.mrf.mxu0
        %925 = vmatprep.mubr.bf16.mxu0 %v574
        %926 = vmatmul.mubr.bf16.gmra.mxu0 %v573
        %v927 = vpop.f32.mrf.mxu0
        %v928 = vadd.f32 %v347, %v927
        %v929 = vpop.f32.mrf.mxu0
        %v930 = vpop.f32.mrf.mxu0
        %v931 = vadd.f32 %v347, %v930
        %v932 = vpop.f32.mrf.mxu0
        %933 = vmatprep.mubr.bf16.mxu0 %v576
        %934 = vmatmul.mubr.bf16.gmra.mxu0 %v575
        %v935 = vpop.f32.mrf.mxu0
        %v936 = vadd.f32 %v347, %v935
        %v937 = vpop.f32.mrf.mxu0
        %v938 = vpop.f32.mrf.mxu0
        %v939 = vadd.f32 %v347, %v938
        %v940 = vpop.f32.mrf.mxu0
        %941 = vmatprep.mubr.bf16.mxu0 %v578
        %942 = vmatmul.mubr.bf16.gmra.mxu0 %v577
        %v943 = vpop.f32.mrf.mxu0
        %v944 = vadd.f32 %v347, %v943
        %v945 = vpop.f32.mrf.mxu0
        %v946 = vpop.f32.mrf.mxu0
        %v947 = vadd.f32 %v347, %v946
        %v948 = vpop.f32.mrf.mxu0
        %949 = vmatprep.mubr.bf16.mxu0 %v580
        %950 = vmatmul.mubr.bf16.gmra.mxu0 %v579
        %v951 = vpop.f32.mrf.mxu0
        %v952 = vadd.f32 %v347, %v951
        %v953 = vpop.f32.mrf.mxu0
        %v954 = vpop.f32.mrf.mxu0
        %v955 = vadd.f32 %v347, %v954
        %v956 = vpop.f32.mrf.mxu0
        %957 = vmatprep.mubr.bf16.mxu0 %v582
        %958 = vmatmul.mubr.bf16.gmra.mxu0 %v581
        %v959 = vpop.f32.mrf.mxu0
        %v960 = vadd.f32 %v347, %v959
        %v961 = vpop.f32.mrf.mxu0
        %v962 = vpop.f32.mrf.mxu0
        %v963 = vadd.f32 %v347, %v962
        %v964 = vpop.f32.mrf.mxu0
        %965 = vmatprep.mubr.bf16.mxu0 %v584
        %966 = vmatmul.mubr.bf16.gmra.mxu0 %v583
        %v967 = vpop.f32.mrf.mxu0
        %v968 = vadd.f32 %v347, %v967
        %v969 = vpop.f32.mrf.mxu0
        %v970 = vpop.f32.mrf.mxu0
        %v971 = vadd.f32 %v347, %v970
        %v972 = vpop.f32.mrf.mxu0
        %973 = vmatprep.mubr.bf16.mxu0 %v586
        %974 = vmatmul.mubr.bf16.gmra.mxu0 %v585
        %v975 = vpop.f32.mrf.mxu0
        %v976 = vadd.f32 %v347, %v975
        %v977 = vpop.f32.mrf.mxu0
        %v978 = vpop.f32.mrf.mxu0
        %v979 = vadd.f32 %v347, %v978
        %v980 = vpop.f32.mrf.mxu0
        %981 = vmatprep.mubr.bf16.mxu0 %v588
        %982 = vmatmul.mubr.bf16.gmra.mxu0 %v587
        %v983 = vpop.f32.mrf.mxu0
        %v984 = vadd.f32 %v347, %v983
        %v985 = vpop.f32.mrf.mxu0
        %v986 = vpop.f32.mrf.mxu0
        %v987 = vadd.f32 %v347, %v986
        %v988 = vpop.f32.mrf.mxu0
        %989 = vmatprep.mubr.bf16.mxu0 %v590
        %990 = vmatmul.mubr.bf16.gmra.mxu0 %v589
        %v991 = vpop.f32.mrf.mxu0
        %v992 = vadd.f32 %v347, %v991
        %v993 = vpop.f32.mrf.mxu0
        %v994 = vpop.f32.mrf.mxu0
        %v995 = vadd.f32 %v347, %v994
        %v996 = vpop.f32.mrf.mxu0
        %997 = vmatprep.mubr.bf16.mxu0 %v592
        %998 = vmatmul.mubr.bf16.gmra.mxu0 %v591
        %v999 = vpop.f32.mrf.mxu0
        %v1000 = vadd.f32 %v347, %v999
        %v1001 = vpop.f32.mrf.mxu0
        %v1002 = vpop.f32.mrf.mxu0
        %v1003 = vadd.f32 %v347, %v1002
        %v1004 = vpop.f32.mrf.mxu0
        %1005 = vmatprep.mubr.bf16.mxu0 %v594
        %1006 = vmatmul.mubr.bf16.gmra.mxu0 %v593
        %v1007 = vpop.f32.mrf.mxu0
        %v1008 = vadd.f32 %v347, %v1007
        %v1009 = vpop.f32.mrf.mxu0
        %v1010 = vpop.f32.mrf.mxu0
        %v1011 = vadd.f32 %v347, %v1010
        %v1012 = vpop.f32.mrf.mxu0
        %1013 = vmatprep.mubr.bf16.mxu0 %v596
        %1014 = vmatmul.mubr.bf16.gmra.mxu0 %v595
        %v1015 = vpop.f32.mrf.mxu0
        %v1016 = vadd.f32 %v347, %v1015
        %v1017 = vpop.f32.mrf.mxu0
        %v1018 = vpop.f32.mrf.mxu0
        %v1019 = vadd.f32 %v347, %v1018
        %v1020 = vpop.f32.mrf.mxu0
        %1021 = vmatprep.mubr.bf16.mxu0 %v598
        %1022 = vmatmul.mubr.bf16.gmra.mxu0 %v597
        %v1023 = vpop.f32.mrf.mxu0
        %v1024 = vadd.f32 %v347, %v1023
        %v1025 = vpop.f32.mrf.mxu0
        %v1026 = vpop.f32.mrf.mxu0
        %v1027 = vadd.f32 %v347, %v1026
        %v1028 = vpop.f32.mrf.mxu0
        %1029 = vmatprep.mubr.bf16.mxu0 %v600
        %1030 = vmatmul.mubr.bf16.gmra.mxu0 %v599
        %v1031 = vpop.f32.mrf.mxu0
        %v1032 = vadd.f32 %v347, %v1031
        %v1033 = vpop.f32.mrf.mxu0
        %v1034 = vpop.f32.mrf.mxu0
        %v1035 = vadd.f32 %v347, %v1034
        %v1036 = vpop.f32.mrf.mxu0
        %1037 = vmatprep.mubr.bf16.mxu0 %v602
        %1038 = vmatmul.mubr.bf16.gmra.mxu0 %v601
        %v1039 = vpop.f32.mrf.mxu0
        %v1040 = vadd.f32 %v347, %v1039
        %v1041 = vpop.f32.mrf.mxu0
        %v1042 = vpop.f32.mrf.mxu0
        %v1043 = vadd.f32 %v347, %v1042
        %v1044 = vpop.f32.mrf.mxu0
        %1045 = vmatprep.mubr.bf16.mxu0 %v604
        %1046 = vmatmul.mubr.bf16.gmra.mxu0 %v603
        %v1047 = vpop.f32.mrf.mxu0
        %v1048 = vadd.f32 %v347, %v1047
        %v1049 = vpop.f32.mrf.mxu0
        %v1050 = vpop.f32.mrf.mxu0
        %v1051 = vadd.f32 %v347, %v1050
        %v1052 = vpop.f32.mrf.mxu0
        %1053 = vdwg.mxu0
        %v1054 = vmax.f32 %v800, 0.0
        %v1055 = vmax.f32 %v803, 0.0
        %v1056 = vmax.f32 %v808, 0.0
        %v1057 = vmax.f32 %v811, 0.0
        %v1058 = vmax.f32 %v816, 0.0
        %v1059 = vmax.f32 %v819, 0.0
        %v1060 = vmax.f32 %v824, 0.0
        %v1061 = vmax.f32 %v827, 0.0
        %v1062 = vmax.f32 %v832, 0.0
        %v1063 = vmax.f32 %v835, 0.0
        %v1064 = vmax.f32 %v840, 0.0
        %v1065 = vmax.f32 %v843, 0.0
        %v1066 = vmax.f32 %v848, 0.0
        %v1067 = vmax.f32 %v851, 0.0
        %v1068 = vmax.f32 %v856, 0.0
        %v1069 = vmax.f32 %v859, 0.0
        %v1070 = vmax.f32 %v864, 0.0
        %v1071 = vmax.f32 %v867, 0.0
        %v1072 = vmax.f32 %v872, 0.0
        %v1073 = vmax.f32 %v875, 0.0
        %v1074 = vmax.f32 %v880, 0.0
        %v1075 = vmax.f32 %v883, 0.0
        %v1076 = vmax.f32 %v888, 0.0
        %v1077 = vmax.f32 %v891, 0.0
        %v1078 = vmax.f32 %v896, 0.0
        %v1079 = vmax.f32 %v899, 0.0
        %v1080 = vmax.f32 %v904, 0.0
        %v1081 = vmax.f32 %v907, 0.0
        %v1082 = vmax.f32 %v912, 0.0
        %v1083 = vmax.f32 %v915, 0.0
        %v1084 = vmax.f32 %v920, 0.0
        %v1085 = vmax.f32 %v923, 0.0
        %v1086 = vmax.f32 %v928, 0.0
        %v1087 = vmax.f32 %v931, 0.0
        %v1088 = vmax.f32 %v936, 0.0
        %v1089 = vmax.f32 %v939, 0.0
        %v1090 = vmax.f32 %v944, 0.0
        %v1091 = vmax.f32 %v947, 0.0
        %v1092 = vmax.f32 %v952, 0.0
        %v1093 = vmax.f32 %v955, 0.0
        %v1094 = vmax.f32 %v960, 0.0
        %v1095 = vmax.f32 %v963, 0.0
        %v1096 = vmax.f32 %v968, 0.0
        %v1097 = vmax.f32 %v971, 0.0
        %v1098 = vmax.f32 %v976, 0.0
        %v1099 = vmax.f32 %v979, 0.0
        %v1100 = vmax.f32 %v984, 0.0
        %v1101 = vmax.f32 %v987, 0.0
        %v1102 = vmax.f32 %v992, 0.0
        %v1103 = vmax.f32 %v995, 0.0
        %v1104 = vmax.f32 %v1000, 0.0
        %v1105 = vmax.f32 %v1003, 0.0
        %v1106 = vmax.f32 %v1008, 0.0
        %v1107 = vmax.f32 %v1011, 0.0
        %v1108 = vmax.f32 %v1016, 0.0
        %v1109 = vmax.f32 %v1019, 0.0
        %v1110 = vmax.f32 %v1024, 0.0
        %v1111 = vmax.f32 %v1027, 0.0
        %v1112 = vmax.f32 %v1032, 0.0
        %v1113 = vmax.f32 %v1035, 0.0
        %v1114 = vmax.f32 %v1040, 0.0
        %v1115 = vmax.f32 %v1043, 0.0
        %v1116 = vmax.f32 %v1048, 0.0
        %v1117 = vmax.f32 %v1051, 0.0
        %vm1118 = vcmask 523264
        %1119 = vst.msk [vmem:[%s243] sm:$0xff] %vm1118, %v1054
        %1120 = vst.msk [vmem:[%s243 + $0x8] sm:$0xff] %vm1118, %v1055
        %1121 = vst.msk [vmem:[%s243 + $0x10] sm:$0xff] %vm1118, %v1056
        %1122 = vst.msk [vmem:[%s243 + $0x18] sm:$0xff] %vm1118, %v1057
        %1123 = vst.msk [vmem:[%s243 + $0x20] sm:$0xff] %vm1118, %v1058
        %1124 = vst.msk [vmem:[%s243 + $0x28] sm:$0xff] %vm1118, %v1059
        %1125 = vst.msk [vmem:[%s243 + $0x30] sm:$0xff] %vm1118, %v1060
        %1126 = vst.msk [vmem:[%s243 + $0x38] sm:$0xff] %vm1118, %v1061
        %1127 = vst.msk [vmem:[%s243 + $0x40] sm:$0xff] %vm1118, %v1062
        %1128 = vst.msk [vmem:[%s243 + $0x48] sm:$0xff] %vm1118, %v1063
        %1129 = vst.msk [vmem:[%s243 + $0x50] sm:$0xff] %vm1118, %v1064
        %1130 = vst.msk [vmem:[%s243 + $0x58] sm:$0xff] %vm1118, %v1065
        %1131 = vst.msk [vmem:[%s243 + $0x60] sm:$0xff] %vm1118, %v1066
        %1132 = vst.msk [vmem:[%s243 + $0x68] sm:$0xff] %vm1118, %v1067
        %1133 = vst.msk [vmem:[%s243 + $0x70] sm:$0xff] %vm1118, %v1068
        %1134 = vst.msk [vmem:[%s243 + $0x78] sm:$0xff] %vm1118, %v1069
        %1135 = vst.msk [vmem:[%s243 + $0x80] sm:$0xff] %vm1118, %v1070
        %1136 = vst.msk [vmem:[%s243 + $0x88] sm:$0xff] %vm1118, %v1071
        %1137 = vst.msk [vmem:[%s243 + $0x90] sm:$0xff] %vm1118, %v1072
        %1138 = vst.msk [vmem:[%s243 + $0x98] sm:$0xff] %vm1118, %v1073
        %1139 = vst.msk [vmem:[%s243 + $0xa0] sm:$0xff] %vm1118, %v1074
        %1140 = vst.msk [vmem:[%s243 + $0xa8] sm:$0xff] %vm1118, %v1075
        %1141 = vst.msk [vmem:[%s243 + $0xb0] sm:$0xff] %vm1118, %v1076
        %1142 = vst.msk [vmem:[%s243 + $0xb8] sm:$0xff] %vm1118, %v1077
        %1143 = vst.msk [vmem:[%s243 + $0xc0] sm:$0xff] %vm1118, %v1078
        %1144 = vst.msk [vmem:[%s243 + $0xc8] sm:$0xff] %vm1118, %v1079
        %1145 = vst.msk [vmem:[%s243 + $0xd0] sm:$0xff] %vm1118, %v1080
        %1146 = vst.msk [vmem:[%s243 + $0xd8] sm:$0xff] %vm1118, %v1081
        %1147 = vst.msk [vmem:[%s243 + $0xe0] sm:$0xff] %vm1118, %v1082
        %1148 = vst.msk [vmem:[%s243 + $0xe8] sm:$0xff] %vm1118, %v1083
        %1149 = vst.msk [vmem:[%s243 + $0xf0] sm:$0xff] %vm1118, %v1084
        %1150 = vst.msk [vmem:[%s243 + $0xf8] sm:$0xff] %vm1118, %v1085
        %1151 = vst.msk [vmem:[%s243 + $0x100] sm:$0xff] %vm1118, %v1086
        %1152 = vst.msk [vmem:[%s243 + $0x108] sm:$0xff] %vm1118, %v1087
        %1153 = vst.msk [vmem:[%s243 + $0x110] sm:$0xff] %vm1118, %v1088
        %1154 = vst.msk [vmem:[%s243 + $0x118] sm:$0xff] %vm1118, %v1089
        %1155 = vst.msk [vmem:[%s243 + $0x120] sm:$0xff] %vm1118, %v1090
        %1156 = vst.msk [vmem:[%s243 + $0x128] sm:$0xff] %vm1118, %v1091
        %1157 = vst.msk [vmem:[%s243 + $0x130] sm:$0xff] %vm1118, %v1092
        %1158 = vst.msk [vmem:[%s243 + $0x138] sm:$0xff] %vm1118, %v1093
        %1159 = vst.msk [vmem:[%s243 + $0x140] sm:$0xff] %vm1118, %v1094
        %1160 = vst.msk [vmem:[%s243 + $0x148] sm:$0xff] %vm1118, %v1095
        %1161 = vst.msk [vmem:[%s243 + $0x150] sm:$0xff] %vm1118, %v1096
        %1162 = vst.msk [vmem:[%s243 + $0x158] sm:$0xff] %vm1118, %v1097
        %1163 = vst.msk [vmem:[%s243 + $0x160] sm:$0xff] %vm1118, %v1098
        %1164 = vst.msk [vmem:[%s243 + $0x168] sm:$0xff] %vm1118, %v1099
        %1165 = vst.msk [vmem:[%s243 + $0x170] sm:$0xff] %vm1118, %v1100
        %1166 = vst.msk [vmem:[%s243 + $0x178] sm:$0xff] %vm1118, %v1101
        %1167 = vst.msk [vmem:[%s243 + $0x180] sm:$0xff] %vm1118, %v1102
        %1168 = vst.msk [vmem:[%s243 + $0x188] sm:$0xff] %vm1118, %v1103
        %1169 = vst.msk [vmem:[%s243 + $0x190] sm:$0xff] %vm1118, %v1104
        %1170 = vst.msk [vmem:[%s243 + $0x198] sm:$0xff] %vm1118, %v1105
        %1171 = vst.msk [vmem:[%s243 + $0x1a0] sm:$0xff] %vm1118, %v1106
        %1172 = vst.msk [vmem:[%s243 + $0x1a8] sm:$0xff] %vm1118, %v1107
        %1173 = vst.msk [vmem:[%s243 + $0x1b0] sm:$0xff] %vm1118, %v1108
        %1174 = vst.msk [vmem:[%s243 + $0x1b8] sm:$0xff] %vm1118, %v1109
        %1175 = vst.msk [vmem:[%s243 + $0x1c0] sm:$0xff] %vm1118, %v1110
        %1176 = vst.msk [vmem:[%s243 + $0x1c8] sm:$0xff] %vm1118, %v1111
        %1177 = vst.msk [vmem:[%s243 + $0x1d0] sm:$0xff] %vm1118, %v1112
        %1178 = vst.msk [vmem:[%s243 + $0x1d8] sm:$0xff] %vm1118, %v1113
        %1179 = vst.msk [vmem:[%s243 + $0x1e0] sm:$0xff] %vm1118, %v1114
        %1180 = vst.msk [vmem:[%s243 + $0x1e8] sm:$0xff] %vm1118, %v1115
        %1181 = vst.msk [vmem:[%s243 + $0x1f0] sm:$0xff] %vm1118, %v1116
        %1182 = vst.msk [vmem:[%s243 + $0x1f8] sm:$0xff] %vm1118, %v1117
        %s1183 = smul.u32 64, %s21
        %p1184 = scmp.lt.s32.totalorder %s1183, 191
        %s1185 = scalar_select %p1184, %s1183, 191
        %p1186 = scmp.lt.s32.totalorder %s22, 0
        %s1187 = scalar_select %p1186, %s22, 0
        %s1188 = sadd.s32 %s1187, %s1185
        %s1189 = smul.addr %s1188, 8
        %s1190 = scalar_lea.vmem %s3, %s1189
        // Predicated region
        $region37: #{tpu_custom_call.1} parent=31 // pred_check
          %p1191 = pneg %p127
        $region38: #{tpu_custom_call.1} parent=31 // pred_check_branch
          %1193 = sbr.rel (%p1191) target = $region40
        $region39: #{tpu_custom_call.1} parent=31 // pred_region
          %s1194 = smul.u32 64, %s21
        $region40: #{tpu_custom_call.1} parent=31 // pred_fallthru
          _
      $region32: #{tpu_custom_call.1} parent=5 // pred_fallthru
        _
      %p1195 = scmp.le.s32.totalorder 2, %s12
      // Predicated region
      $region41: #{tpu_custom_call.1} parent=5 // pred_check
        %p1196 = pneg %p1195
      $region42: #{tpu_custom_call.1} parent=5 // pred_check_branch
        %1198 = sbr.rel (%p1196) target = $region44
      $region43: #{tpu_custom_call.1} parent=5 // pred_region
        %s1199 = ssub.s32 %s12, 2
        // Predicated region
        $region45: #{tpu_custom_call.1} parent=43 // pred_check
          %p1200 = pneg %p133
        $region46: #{tpu_custom_call.1} parent=43 // pred_check_branch
          %1202 = sbr.rel (%p1200) target = $region48
        $region47: #{tpu_custom_call.1} parent=43 // pred_region
          %s1203 = smul.u32 64, %s23
          %p1204 = scmp.lt.s32.totalorder %s1203, 191
          %s1205 = scalar_select %p1204, %s1203, 191
          %p1206 = scmp.lt.s32.totalorder %s24, 0
          %s1207 = scalar_select %p1206, %s24, 0
          %s1208 = sadd.s32 %s1207, %s1205
          %s1209 = smul.addr %s1208, 8
          %s1210 = scalar_lea.vmem %s3, %s1209
        $region48: #{tpu_custom_call.1} parent=43 // pred_fallthru
          _
      $region44: #{tpu_custom_call.1} parent=5 // pred_fallthru
        _
    $region6: #{tpu_custom_call.1} parent=1 // loop_footer
      %s16 = sadd.s32 1, %s12
    $region7: #{tpu_custom_call.1} parent=1 // loop_footer_branch
      %11 = sbr.rel target = $region3
    $region8: #{tpu_custom_call.1} parent=1 // loop_exit
      _
    %1211 = vsyncpa [#allocation3], 1
    %s1212 = scalar_lea.sflag [#allocation3], 1
    %1213 = vsyncpa %s1212, 1

</llo_original>
